<compile_context>
chip_gen: v6e
topology: v6e:2x2x1
jax: 0.10.0
libtpu: 0.0.40
codegen_flags: <defaults>
</compile_context>

<pallas_src>
import jax
import jax.numpy as jnp
from jax.experimental import pallas as pl
from jax.experimental.pallas import tpu as pltpu


def cws_kernel(x_ref, w_ref, b_ref, labels_ref, tag_ref, nll_ref):
    x = x_ref[...]            # (TM, H) bf16
    w = w_ref[...]            # (H, C)  bf16   (VMEM-resident across grid)
    b = b_ref[...]            # (1, C)  f32
    labels = labels_ref[...]  # (TM, 1) i32

    tm = x.shape[0]
    c = w.shape[1]

    # Linear in bf16 on the MXU, f32 accumulation; bias added in f32.
    logits = jnp.dot(x, w, preferred_element_type=jnp.float32) + b  # (TM, C) f32

    # Numerically stable log-sum-exp pieces (kept as (TM, 1) columns).
    m = jnp.max(logits, axis=-1, keepdims=True)                      # (TM, 1)
    lse = jnp.log(jnp.sum(jnp.exp(logits - m), axis=-1, keepdims=True))

    # Class-index iota built once per tile; reused for CE pick and argmax.
    class_idx = jax.lax.broadcasted_iota(jnp.int32, (tm, c), 1)      # (TM, C)

    # Fused CE pick: nll = (m + lse) - logits[label]
    onehot = (class_idx == labels).astype(jnp.float32)               # (TM, C)
    picked = jnp.sum(onehot * logits, axis=-1, keepdims=True)        # (TM, 1)
    valid = (labels != 0).astype(jnp.float32)                        # (TM, 1)
    nll_ref[...] = (m + lse - picked) * valid                        # masked NLL

    # argmax over classes (first max index, matching torch.argmax tie-breaking)
    tag = jnp.min(jnp.where(logits == m, class_idx, c),
                  axis=-1, keepdims=True)                            # (TM, 1)
    tag_ref[...] = tag.astype(jnp.int32)


def _round_up(a, b):
    return (a + b - 1) // b * b


def cws_forward(sequence_output, weight, bias, labels, *, block_rows=512):
    """sequence_output: (B,S,H) f32; weight: (H,C) f32; bias: (C,) f32; labels: (B,S) int."""
    B, S, H = sequence_output.shape
    C = weight.shape[1]
    N = B * S

    # Tile size: multiple of 128 rows, capped so each buffer is a few MB at
    # BERT sizes (safe within v7x's 64 MiB VMEM without raising vmem limits).
    tm = min(block_rows, _round_up(N, 128))
    n_pad = _round_up(N, tm)
    grid = n_pad // tm

    x = sequence_output.reshape(N, H).astype(jnp.bfloat16)
    w = weight.astype(jnp.bfloat16)
    b2 = bias.reshape(1, C).astype(jnp.float32)
    lab = labels.reshape(N, 1).astype(jnp.int32)

    if n_pad != N:
        # Padded rows get label 0 (= ignore_index) so they contribute nothing.
        x = jnp.pad(x, ((0, n_pad - N), (0, 0)))
        lab = jnp.pad(lab, ((0, n_pad - N), (0, 0)))

    tag_out, nll_masked = pl.pallas_call(
        cws_kernel,
        out_shape=(
            jax.ShapeDtypeStruct((n_pad, 1), jnp.int32),
            jax.ShapeDtypeStruct((n_pad, 1), jnp.float32),
        ),
        grid=(grid,),
        in_specs=[
            pl.BlockSpec((tm, H), lambda i: (i, 0)),   # streamed activations
            pl.BlockSpec((H, C), lambda i: (0, 0)),    # resident weight
            pl.BlockSpec((1, C), lambda i: (0, 0)),    # resident bias
            pl.BlockSpec((tm, 1), lambda i: (i, 0)),   # labels
        ],
        out_specs=(
            pl.BlockSpec((tm, 1), lambda i: (i, 0)),   # tags
            pl.BlockSpec((tm, 1), lambda i: (i, 0)),   # masked per-token NLL
        ),
        compiler_params=pltpu.CompilerParams(
            dimension_semantics=("parallel",),         # shards tiles across TCs on v7x
        ),
    )(x, w, b2, lab)

    # Single global mean over non-ignored tokens (divide exactly once).
    # Note: if every label is 0 this is 0/0 = NaN, matching PyTorch's
    # CrossEntropyLoss(ignore_index=0) behaviour.
    count = jnp.sum((lab != 0).astype(jnp.float32))
    loss = jnp.sum(nll_masked) / count
    tag_seq = tag_out[:N, 0].reshape(B, S)
    return loss, tag_seq


def reference_forward(sequence_output, weight, bias, labels):
    # Same bf16 matmul / f32-accumulate numerics as the kernel.
    x = sequence_output.astype(jnp.bfloat16)
    w = weight.astype(jnp.bfloat16)
    logits = jnp.einsum("bsh,hc->bsc", x, w,
                        preferred_element_type=jnp.float32) + bias
    logp = jax.nn.log_softmax(logits, axis=-1)
    B, S, C = logits.shape
    flat_logp = logp.reshape(-1, C)
    flat_lab = labels.reshape(-1)
    picked = jnp.take_along_axis(flat_logp, flat_lab[:, None], axis=-1)[:, 0]
    valid = (flat_lab != 0).astype(jnp.float32)
    loss = -jnp.sum(picked * valid) / jnp.sum(valid)
    tag = jnp.argmax(logits, axis=-1)
    return loss, tag


if __name__ == "__main__":
    B, S, H, C = 2, 8, 32, 8  # batch, seq, hidden_size, class_size

    key = jax.random.PRNGKey(0)
    k_x, k_w, k_b, k_lab = jax.random.split(key, 4)

    # `sequence_output` stands in for the external BERT encoder output.
    sequence_output = jax.random.normal(k_x, (B, S, H), dtype=jnp.float32)
    # nn.Linear(hidden_size, class_size): torch weight is (C, H); stored as (H, C).
    weight = jax.random.normal(k_w, (H, C), dtype=jnp.float32) * (1.0 / jnp.sqrt(H))
    bias = jax.random.normal(k_b, (C,), dtype=jnp.float32) * 0.01
    # labels in [0, C), label 0 is ignore_index.
    labels = jax.random.randint(k_lab, (B, S), 0, C, dtype=jnp.int32)

    loss, tag_seq = cws_forward(sequence_output, weight, bias, labels)
    loss = jax.block_until_ready(loss)
    tag_seq = jax.block_until_ready(tag_seq)

    ref_loss, ref_tag = reference_forward(sequence_output, weight, bias, labels)
    assert jnp.allclose(loss, ref_loss, rtol=1e-4, atol=1e-4), (loss, ref_loss)
    assert jnp.all(tag_seq == ref_tag.astype(jnp.int32))

    # Second check: exercises the multi-tile grid + ragged last tile padding
    # (N = 640 tokens -> two 512-row tiles, 384 padded rows in the last one).
    B2, S2 = 2, 320
    k_x2, k_lab2 = jax.random.split(k_x)
    seq2 = jax.random.normal(k_x2, (B2, S2, H), dtype=jnp.float32)
    labels2 = jax.random.randint(k_lab2, (B2, S2), 0, C, dtype=jnp.int32)

    loss2, tag2 = cws_forward(seq2, weight, bias, labels2)
    loss2 = jax.block_until_ready(loss2)
    tag2 = jax.block_until_ready(tag2)

    ref_loss2, ref_tag2 = reference_forward(seq2, weight, bias, labels2)
    assert jnp.allclose(loss2, ref_loss2, rtol=1e-4, atol=1e-4), (loss2, ref_loss2)
    assert jnp.all(tag2 == ref_tag2.astype(jnp.int32))

    print("KERNEL_OK")
</pallas_src>

<mosaic_0001>
module attributes {stable_mosaic.version = 11 : i64} {
  func.func @cws_kernel(%arg0: i32, %arg1: memref<128x32xbf16, #tpu.memory_space<vmem>>, %arg2: memref<32x8xbf16, #tpu.memory_space<vmem>>, %arg3: memref<1x8xf32, #tpu.memory_space<vmem>>, %arg4: memref<128x1xi32, #tpu.memory_space<vmem>>, %arg5: memref<128x1xi32, #tpu.memory_space<vmem>>, %arg6: memref<128x1xf32, #tpu.memory_space<vmem>>) attributes {dimension_semantics = [#tpu.dimension_semantics<parallel>], iteration_bounds = array<i64: 1>, scalar_prefetch = 0 : i64, scratch_operands = 0 : i64, tpu.core_type = #tpu.core_type<tc>, window_params = [{transform_indices = @transform_0, window_bounds = array<i64: 128, 32>}, {pipeline_mode = #tpu.pipeline_mode<synchronous>, transform_indices = @transform_1, window_bounds = array<i64: 32, 8>}, {pipeline_mode = #tpu.pipeline_mode<synchronous>, transform_indices = @transform_2, window_bounds = array<i64: 1, 8>}, {transform_indices = @transform_3, window_bounds = array<i64: 128, 1>}, {transform_indices = @transform_4, window_bounds = array<i64: 128, 1>}, {transform_indices = @transform_5, window_bounds = array<i64: 128, 1>}]} {
    %c0 = arith.constant 0 : index
    %c0_0 = arith.constant 0 : index
    %0 = vector.load %arg1[%c0, %c0_0] : memref<128x32xbf16, #tpu.memory_space<vmem>>, vector<128x32xbf16>
    %c0_1 = arith.constant 0 : index
    %c0_2 = arith.constant 0 : index
    %1 = vector.load %arg2[%c0_1, %c0_2] : memref<32x8xbf16, #tpu.memory_space<vmem>>, vector<32x8xbf16>
    %c0_3 = arith.constant 0 : index
    %c0_4 = arith.constant 0 : index
    %2 = vector.load %arg3[%c0_3, %c0_4] : memref<1x8xf32, #tpu.memory_space<vmem>>, vector<1x8xf32>
    %c0_5 = arith.constant 0 : index
    %c0_6 = arith.constant 0 : index
    %3 = vector.load %arg4[%c0_5, %c0_6] : memref<128x1xi32, #tpu.memory_space<vmem>>, vector<128x1xi32>
    %cst = arith.constant dense<0.000000e+00> : vector<128x8xf32>
    %4 = tpu.matmul %0, %1, %cst {dimension_numbers = #tpu.dot_dimension_numbers<[1], [0], [0], [1], [0, 0, 1, 1], [], []>} : vector<128x32xbf16>, vector<32x8xbf16>, vector<128x8xf32> -> vector<128x8xf32>
    %5 = vector.broadcast %2 : vector<1x8xf32> to vector<128x8xf32>
    %6 = arith.addf %4, %5 : vector<128x8xf32>
    %cst_7 = arith.constant dense<0xFF800000> : vector<128xf32>
    %7 = vector.multi_reduction <maximumf>, %6, %cst_7 [1] : vector<128x8xf32> to vector<128xf32>
    %8 = vector.shape_cast %7 : vector<128xf32> to vector<128x1xf32>
    %9 = vector.broadcast %8 : vector<128x1xf32> to vector<128x8xf32>
    %10 = arith.subf %6, %9 : vector<128x8xf32>
    %11 = math.exp %10 : vector<128x8xf32>
    %cst_8 = arith.constant dense<0.000000e+00> : vector<128xf32>
    %12 = vector.multi_reduction <add>, %11, %cst_8 [1] : vector<128x8xf32> to vector<128xf32>
    %13 = vector.shape_cast %12 : vector<128xf32> to vector<128x1xf32>
    %14 = math.log %13 : vector<128x1xf32>
    %15 = tpu.iota {dimensions = array<i32: 1>} : vector<128x8xi32>
    %16 = vector.broadcast %3 : vector<128x1xi32> to vector<128x8xi32>
    %17 = arith.cmpi eq, %15, %16 : vector<128x8xi32>
    %18 = arith.extui %17 : vector<128x8xi1> to vector<128x8xi32>
    %19 = arith.sitofp %18 : vector<128x8xi32> to vector<128x8xf32>
    %20 = arith.mulf %19, %6 : vector<128x8xf32>
    %cst_9 = arith.constant dense<0.000000e+00> : vector<128xf32>
    %21 = vector.multi_reduction <add>, %20, %cst_9 [1] : vector<128x8xf32> to vector<128xf32>
    %22 = vector.shape_cast %21 : vector<128xf32> to vector<128x1xf32>
    %c0_i32 = arith.constant 0 : i32
    %23 = vector.broadcast %c0_i32 : i32 to vector<128x1xi32>
    %24 = arith.cmpi ne, %3, %23 : vector<128x1xi32>
    %25 = arith.extui %24 : vector<128x1xi1> to vector<128x1xi32>
    %26 = arith.sitofp %25 : vector<128x1xi32> to vector<128x1xf32>
    %27 = arith.addf %8, %14 : vector<128x1xf32>
    %28 = arith.subf %27, %22 : vector<128x1xf32>
    %29 = arith.mulf %28, %26 : vector<128x1xf32>
    %c0_10 = arith.constant 0 : index
    %c0_11 = arith.constant 0 : index
    %30 = vector.load %arg6[%c0_10, %c0_11] : memref<128x1xf32, #tpu.memory_space<vmem>>, vector<128x1xf32>
    tpu.vector_store %arg6[%c0_10, %c0_11], %29 {strides = array<i32>} : memref<128x1xf32, #tpu.memory_space<vmem>>, vector<128x1xf32>,
    %31 = vector.broadcast %8 : vector<128x1xf32> to vector<128x8xf32>
    %32 = arith.cmpf oeq, %6, %31 : vector<128x8xf32>
    %c8_i32 = arith.constant 8 : i32
    %33 = vector.broadcast %c8_i32 : i32 to vector<128x8xi32>
    %34 = arith.select %32, %15, %33 : vector<128x8xi1>, vector<128x8xi32>
    %cst_12 = arith.constant dense<2147483647> : vector<128xi32>
    %35 = vector.multi_reduction <minsi>, %34, %cst_12 [1] : vector<128x8xi32> to vector<128xi32>
    %36 = vector.shape_cast %35 : vector<128xi32> to vector<128x1xi32>
    %c0_13 = arith.constant 0 : index
    %c0_14 = arith.constant 0 : index
    %37 = vector.load %arg5[%c0_13, %c0_14] : memref<128x1xi32, #tpu.memory_space<vmem>>, vector<128x1xi32>
    tpu.vector_store %arg5[%c0_13, %c0_14], %36 {strides = array<i32>} : memref<128x1xi32, #tpu.memory_space<vmem>>, vector<128x1xi32>,
    return
  }
  func.func @transform_0(%arg0: i32) -> (i32, i32) {
    %c0_i32 = arith.constant 0 : i32
    %c0_i32_0 = arith.constant 0 : i32
    return %arg0, %c0_i32 : i32, i32
  }
  func.func @transform_1(%arg0: i32) -> (i32, i32) {
    %c0_i32 = arith.constant 0 : i32
    %c0_i32_0 = arith.constant 0 : i32
    %c0_i32_1 = arith.constant 0 : i32
    return %c0_i32, %c0_i32_0 : i32, i32
  }
  func.func @transform_2(%arg0: i32) -> (i32, i32) {
    %c0_i32 = arith.constant 0 : i32
    %c0_i32_0 = arith.constant 0 : i32
    %c0_i32_1 = arith.constant 0 : i32
    return %c0_i32, %c0_i32_0 : i32, i32
  }
  func.func @transform_3(%arg0: i32) -> (i32, i32) {
    %c0_i32 = arith.constant 0 : i32
    %c0_i32_0 = arith.constant 0 : i32
    return %arg0, %c0_i32 : i32, i32
  }
  func.func @transform_4(%arg0: i32) -> (i32, i32) {
    %c0_i32 = arith.constant 0 : i32
    %c0_i32_0 = arith.constant 0 : i32
    return %arg0, %c0_i32 : i32, i32
  }
  func.func @transform_5(%arg0: i32) -> (i32, i32) {
    %c0_i32 = arith.constant 0 : i32
    %c0_i32_0 = arith.constant 0 : i32
    return %arg0, %c0_i32 : i32, i32
  }
}

</mosaic_0001>

<llo_original>
// kernel: tpu_custom_call.1
$region0: #{tpu_custom_call.1}
  #allocation0 [shape = 'u32[]', space=smem, size = 0x4, offset = 0x4, fixed_abs, tag = 'smem constant byte address 0x4 - core index']
  #allocation1 [shape = 'u32[144,128]{1,0:T(1,128)}', space=vmem, size = 0x12000, scoped, tag = 'internal scratch']
  %s0 = inlined_call_operand.vmem [shape: bf16[128,32], index: 0, kind: input, shape index: {}]
  %s1 = inlined_call_operand.vmem [shape: bf16[32,8], index: 1, kind: input, shape index: {}]
  %s2 = inlined_call_operand.vmem [shape: f32[1,8], index: 2, kind: input, shape index: {}]
  %s3 = inlined_call_operand.vmem [shape: s32[128,1], index: 3, kind: input, shape index: {}]
  %s4 = inlined_call_operand.vmem [shape: s32[128,1], index: 4, kind: output, shape index: {0}]
  %s5 = inlined_call_operand.vmem [shape: f32[128,1], index: 5, kind: output, shape index: {1}]
  %6 = xla_tuple %s4, %s5
  %s7 = sld [smem:[#allocation0]]
  $region34: #{tpu_custom_call.1} parent=0
    _
  %s9 = ssub.s32 1, %s7
  %s10 = scalar_select 0, %s9, %s7
  // Predicated region
  $region2: #{tpu_custom_call.1} parent=0 // pred_check
    _
  $region3: #{tpu_custom_call.1} parent=0 // pred_check_branch
    %12 = sbr.rel (0) target = $region5
  $region4: #{tpu_custom_call.1} parent=0 // pred_region
    _
  $region5: #{tpu_custom_call.1} parent=0 // pred_fallthru
    _
  // Predicated region
  $region6: #{tpu_custom_call.1} parent=0 // pred_check
    _
  $region7: #{tpu_custom_call.1} parent=0 // pred_check_branch
    %14 = sbr.rel (0) target = $region9
  $region8: #{tpu_custom_call.1} parent=0 // pred_region
    _
  $region9: #{tpu_custom_call.1} parent=0 // pred_fallthru
    _
  // Predicated region
  $region10: #{tpu_custom_call.1} parent=0 // pred_check
    _
  $region11: #{tpu_custom_call.1} parent=0 // pred_check_branch
    %16 = sbr.rel (0) target = $region13
  $region12: #{tpu_custom_call.1} parent=0 // pred_region
    _
  $region13: #{tpu_custom_call.1} parent=0 // pred_fallthru
    _
  // Predicated region
  $region14: #{tpu_custom_call.1} parent=0 // pred_check
    _
  $region15: #{tpu_custom_call.1} parent=0 // pred_check_branch
    %18 = sbr.rel (0) target = $region17
  $region16: #{tpu_custom_call.1} parent=0 // pred_region
    _
  $region17: #{tpu_custom_call.1} parent=0 // pred_fallthru
    _
  %v20 = vld [vmem:[%s0] sm:$0xf]
  %v21 = vld [vmem:[%s0 + $0x4] sm:$0xf]
  %v22 = vld [vmem:[%s0 + $0x8] sm:$0xf]
  %v23 = vld [vmem:[%s0 + $0xc] sm:$0xf]
  %v24 = vld [vmem:[%s0 + $0x10] sm:$0xf]
  %v25 = vld [vmem:[%s0 + $0x14] sm:$0xf]
  %v26 = vld [vmem:[%s0 + $0x18] sm:$0xf]
  %v27 = vld [vmem:[%s0 + $0x1c] sm:$0xf]
  %v28 = vld [vmem:[%s0 + $0x20] sm:$0xf]
  %v29 = vld [vmem:[%s0 + $0x24] sm:$0xf]
  %v30 = vld [vmem:[%s0 + $0x28] sm:$0xf]
  %v31 = vld [vmem:[%s0 + $0x2c] sm:$0xf]
  %v32 = vld [vmem:[%s0 + $0x30] sm:$0xf]
  %v33 = vld [vmem:[%s0 + $0x34] sm:$0xf]
  %v34 = vld [vmem:[%s0 + $0x38] sm:$0xf]
  %v35 = vld [vmem:[%s0 + $0x3c] sm:$0xf]
  %v36 = vld [vmem:[%s1] sm:$0xf]
  %v37 = vld [vmem:[%s1 + $0x4] sm:$0xf]
  %v38 = vld [vmem:[%s1 + $0x8] sm:$0xf]
  %v39 = vld [vmem:[%s1 + $0xc] sm:$0xf]
  %v40 = vld [vmem:[%s2] sm:$0x1]
  %v41 = vld [vmem:[%s3] sm:$0xff]
  %v42 = vld [vmem:[%s3 + $0x8] sm:$0xff]
  %v43 = vld [vmem:[%s3 + $0x10] sm:$0xff]
  %v44 = vld [vmem:[%s3 + $0x18] sm:$0xff]
  %v45 = vld [vmem:[%s3 + $0x20] sm:$0xff]
  %v46 = vld [vmem:[%s3 + $0x28] sm:$0xff]
  %v47 = vld [vmem:[%s3 + $0x30] sm:$0xff]
  %v48 = vld [vmem:[%s3 + $0x38] sm:$0xff]
  %v49 = vld [vmem:[%s3 + $0x40] sm:$0xff]
  %v50 = vld [vmem:[%s3 + $0x48] sm:$0xff]
  %v51 = vld [vmem:[%s3 + $0x50] sm:$0xff]
  %v52 = vld [vmem:[%s3 + $0x58] sm:$0xff]
  %v53 = vld [vmem:[%s3 + $0x60] sm:$0xff]
  %v54 = vld [vmem:[%s3 + $0x68] sm:$0xff]
  %v55 = vld [vmem:[%s3 + $0x70] sm:$0xff]
  %v56 = vld [vmem:[%s3 + $0x78] sm:$0xff]
  %v58 = vlaneseq
  %v59 = vshrl.u32 %v58, 7
  %v60 = vsub.s32 0, %v59
  %v61 = vrot.slane %v40, %v60
  %v79 = vunpack.c.l.b16 %v20
  %v80 = vunpack.c.l.b16 %v21
  %v81 = vunpack.c.l.b16 %v22
  %v82 = vunpack.c.l.b16 %v23
  %v83 = vunpack.c.l.b16 %v24
  %v84 = vunpack.c.l.b16 %v25
  %v85 = vunpack.c.l.b16 %v26
  %v86 = vunpack.c.l.b16 %v27
  %v87 = vunpack.c.l.b16 %v28
  %v88 = vunpack.c.l.b16 %v29
  %v89 = vunpack.c.l.b16 %v30
  %v90 = vunpack.c.l.b16 %v31
  %v91 = vunpack.c.l.b16 %v32
  %v92 = vunpack.c.l.b16 %v33
  %v93 = vunpack.c.l.b16 %v34
  %v94 = vunpack.c.l.b16 %v35
  %v95 = vpack.c.b16 %v80, %v79
  %v96 = vpack.c.b16 %v82, %v81
  %v97 = vpack.c.b16 %v84, %v83
  %v98 = vpack.c.b16 %v86, %v85
  %v99 = vpack.c.b16 %v88, %v87
  %v100 = vpack.c.b16 %v90, %v89
  %v101 = vpack.c.b16 %v92, %v91
  %v102 = vpack.c.b16 %v94, %v93
  %v107 = vunpack.c.l.b16 %v36
  %v108 = vunpack.c.l.b16 %v37
  %v109 = vunpack.c.l.b16 %v38
  %v110 = vunpack.c.l.b16 %v39
  %v111 = vpack.c.b16 %v108, %v107
  %v112 = vpack.c.b16 %v110, %v109
  %vm115 = vcmask 261120
  %v117 = vsel %vm115, %v95, 0
  %v120 = vsel %vm115, %v96, 0
  %v123 = vsel %vm115, %v97, 0
  %v126 = vsel %vm115, %v98, 0
  %v129 = vsel %vm115, %v99, 0
  %v132 = vsel %vm115, %v100, 0
  %v135 = vsel %vm115, %v101, 0
  %v138 = vsel %vm115, %v102, 0
  %140 = vmatprep.subr.bf16.mxu0 0
  %141 = vmatpush1.bf16.msra.mxu0 0
  %142 = vmatprep.subr.bf16.mxu0 0
  %143 = vmatpush1.bf16.msra.mxu0 0
  %144 = vmatprep.subr.bf16.mxu0 0
  %145 = vmatpush1.bf16.msra.mxu0 0
  %146 = vmatprep.subr.bf16.mxu0 0
  %147 = vmatpush1.bf16.msra.mxu0 0
  %148 = vmatprep.subr.bf16.mxu0 0
  %149 = vmatpush1.bf16.msra.mxu0 0
  %150 = vmatprep.subr.bf16.mxu0 0
  %151 = vmatpush1.bf16.msra.mxu0 0
  %152 = vmatprep.subr.bf16.mxu0 0
  %153 = vmatpush1.bf16.msra.mxu0 %v112
  %154 = vmatprep.subr.bf16.mxu0 0
  %155 = vmatpush1.bf16.msra.mxu0 %v111
  %156 = vmatprep.subr.bf16.mxu0 0
  %157 = vmatpush2.bf16.msra.mxu0 0
  %158 = vmatprep.subr.bf16.mxu0 0
  %159 = vmatpush2.bf16.msra.mxu0 0
  %160 = vmatprep.subr.bf16.mxu0 0
  %161 = vmatpush2.bf16.msra.mxu0 0
  %162 = vmatprep.subr.bf16.mxu0 0
  %163 = vmatpush2.bf16.msra.mxu0 0
  %164 = vmatprep.subr.bf16.mxu0 0
  %165 = vmatpush2.bf16.msra.mxu0 0
  %166 = vmatprep.subr.bf16.mxu0 0
  %167 = vmatpush2.bf16.msra.mxu0 0
  %168 = vmatprep.subr.bf16.mxu0 0
  %169 = vmatpush2.bf16.msra.mxu0 0
  %170 = vmatprep.subr.bf16.mxu0 0
  %171 = vmatpush2.bf16.msra.mxu0 0
  %172 = vmatprep.mubr.bf16.mxu0 0
  %173 = vmatmul.mubr.bf16.gmra.mxu0 %v117
  %v174 = vpop.f32.mrf.mxu0
  %v175 = vadd.f32 %v61, %v174
  %v176 = vpop.f32.mrf.mxu0
  %v177 = vpop.f32.mrf.mxu0
  %v178 = vadd.f32 %v61, %v177
  %v179 = vpop.f32.mrf.mxu0
  %180 = vmatprep.mubr.bf16.mxu0 0
  %181 = vmatmul.mubr.bf16.gmra.mxu0 %v120
  %v182 = vpop.f32.mrf.mxu0
  %v183 = vadd.f32 %v61, %v182
  %v184 = vpop.f32.mrf.mxu0
  %v185 = vpop.f32.mrf.mxu0
  %v186 = vadd.f32 %v61, %v185
  %v187 = vpop.f32.mrf.mxu0
  %188 = vmatprep.mubr.bf16.mxu0 0
  %189 = vmatmul.mubr.bf16.gmra.mxu0 %v123
  %v190 = vpop.f32.mrf.mxu0
  %v191 = vadd.f32 %v61, %v190
  %v192 = vpop.f32.mrf.mxu0
  %v193 = vpop.f32.mrf.mxu0
  %v194 = vadd.f32 %v61, %v193
  %v195 = vpop.f32.mrf.mxu0
  %196 = vmatprep.mubr.bf16.mxu0 0
  %197 = vmatmul.mubr.bf16.gmra.mxu0 %v126
  %v198 = vpop.f32.mrf.mxu0
  %v199 = vadd.f32 %v61, %v198
  %v200 = vpop.f32.mrf.mxu0
  %v201 = vpop.f32.mrf.mxu0
  %v202 = vadd.f32 %v61, %v201
  %v203 = vpop.f32.mrf.mxu0
  %204 = vmatprep.mubr.bf16.mxu0 0
  %205 = vmatmul.mubr.bf16.gmra.mxu0 %v129
  %v206 = vpop.f32.mrf.mxu0
  %v207 = vadd.f32 %v61, %v206
  %v208 = vpop.f32.mrf.mxu0
  %v209 = vpop.f32.mrf.mxu0
  %v210 = vadd.f32 %v61, %v209
  %v211 = vpop.f32.mrf.mxu0
  %212 = vmatprep.mubr.bf16.mxu0 0
  %213 = vmatmul.mubr.bf16.gmra.mxu0 %v132
  %v214 = vpop.f32.mrf.mxu0
  %v215 = vadd.f32 %v61, %v214
  %v216 = vpop.f32.mrf.mxu0
  %v217 = vpop.f32.mrf.mxu0
  %v218 = vadd.f32 %v61, %v217
  %v219 = vpop.f32.mrf.mxu0
  %220 = vmatprep.mubr.bf16.mxu0 0
  %221 = vmatmul.mubr.bf16.gmra.mxu0 %v135
  %v222 = vpop.f32.mrf.mxu0
  %v223 = vadd.f32 %v61, %v222
  %v224 = vpop.f32.mrf.mxu0
  %v225 = vpop.f32.mrf.mxu0
  %v226 = vadd.f32 %v61, %v225
  %v227 = vpop.f32.mrf.mxu0
  %228 = vmatprep.mubr.bf16.mxu0 0
  %229 = vmatmul.mubr.bf16.gmra.mxu0 %v138
  %v230 = vpop.f32.mrf.mxu0
  %v231 = vadd.f32 %v61, %v230
  %v232 = vpop.f32.mrf.mxu0
  %v233 = vpop.f32.mrf.mxu0
  %v234 = vadd.f32 %v61, %v233
  %v235 = vpop.f32.mrf.mxu0
  %236 = vdwg.mxu0
  %vm237 = vcmask 64512
  %v238 = vsel %vm237, %v175, -inf
  %239 = vmax.xlane.f32.xlu0 %v238
  %v240 = vpop.xlane.xlu0 %239
  %v241 = vsel %vm237, %v178, -inf
  %242 = vmax.xlane.f32.xlu0 %v241
  %v243 = vpop.xlane.xlu0 %242
  %v244 = vsel %vm237, %v183, -inf
  %245 = vmax.xlane.f32.xlu0 %v244
  %v246 = vpop.xlane.xlu0 %245
  %v247 = vsel %vm237, %v186, -inf
  %248 = vmax.xlane.f32.xlu0 %v247
  %v249 = vpop.xlane.xlu0 %248
  %v250 = vsel %vm237, %v191, -inf
  %251 = vmax.xlane.f32.xlu0 %v250
  %v252 = vpop.xlane.xlu0 %251
  %v253 = vsel %vm237, %v194, -inf
  %254 = vmax.xlane.f32.xlu0 %v253
  %v255 = vpop.xlane.xlu0 %254
  %v256 = vsel %vm237, %v199, -inf
  %257 = vmax.xlane.f32.xlu0 %v256
  %v258 = vpop.xlane.xlu0 %257
  %v259 = vsel %vm237, %v202, -inf
  %260 = vmax.xlane.f32.xlu0 %v259
  %v261 = vpop.xlane.xlu0 %260
  %v262 = vsel %vm237, %v207, -inf
  %263 = vmax.xlane.f32.xlu0 %v262
  %v264 = vpop.xlane.xlu0 %263
  %v265 = vsel %vm237, %v210, -inf
  %266 = vmax.xlane.f32.xlu0 %v265
  %v267 = vpop.xlane.xlu0 %266
  %v268 = vsel %vm237, %v215, -inf
  %269 = vmax.xlane.f32.xlu0 %v268
  %v270 = vpop.xlane.xlu0 %269
  %v271 = vsel %vm237, %v218, -inf
  %272 = vmax.xlane.f32.xlu0 %v271
  %v273 = vpop.xlane.xlu0 %272
  %v274 = vsel %vm237, %v223, -inf
  %275 = vmax.xlane.f32.xlu0 %v274
  %v276 = vpop.xlane.xlu0 %275
  %v277 = vsel %vm237, %v226, -inf
  %278 = vmax.xlane.f32.xlu0 %v277
  %v279 = vpop.xlane.xlu0 %278
  %v280 = vsel %vm237, %v231, -inf
  %281 = vmax.xlane.f32.xlu0 %v280
  %v282 = vpop.xlane.xlu0 %281
  %v283 = vsel %vm237, %v234, -inf
  %284 = vmax.xlane.f32.xlu0 %v283
  %v285 = vpop.xlane.xlu0 %284
  %v286 = vsub.f32 %v175, %v240
  %v287 = vsub.f32 %v178, %v243
  %v288 = vsub.f32 %v183, %v246
  %v289 = vsub.f32 %v186, %v249
  %v290 = vsub.f32 %v191, %v252
  %v291 = vsub.f32 %v194, %v255
  %v292 = vsub.f32 %v199, %v258
  %v293 = vsub.f32 %v202, %v261
  %v294 = vsub.f32 %v207, %v264
  %v295 = vsub.f32 %v210, %v267
  %v296 = vsub.f32 %v215, %v270
  %v297 = vsub.f32 %v218, %v273
  %v298 = vsub.f32 %v223, %v276
  %v299 = vsub.f32 %v226, %v279
  %v300 = vsub.f32 %v231, %v282
  %v301 = vsub.f32 %v234, %v285
  %v302 = vmul.f32 %v286, 1.442695
  %v303 = vpow.pop %v302
  %v304 = vmul.f32 %v287, 1.442695
  %v305 = vpow.pop %v304
  %v306 = vmul.f32 %v288, 1.442695
  %v307 = vpow.pop %v306
  %v308 = vmul.f32 %v289, 1.442695
  %v309 = vpow.pop %v308
  %v310 = vmul.f32 %v290, 1.442695
  %v311 = vpow.pop %v310
  %v312 = vmul.f32 %v291, 1.442695
  %v313 = vpow.pop %v312
  %v314 = vmul.f32 %v292, 1.442695
  %v315 = vpow.pop %v314
  %v316 = vmul.f32 %v293, 1.442695
  %v317 = vpow.pop %v316
  %v318 = vmul.f32 %v294, 1.442695
  %v319 = vpow.pop %v318
  %v320 = vmul.f32 %v295, 1.442695
  %v321 = vpow.pop %v320
  %v322 = vmul.f32 %v296, 1.442695
  %v323 = vpow.pop %v322
  %v324 = vmul.f32 %v297, 1.442695
  %v325 = vpow.pop %v324
  %v326 = vmul.f32 %v298, 1.442695
  %v327 = vpow.pop %v326
  %v328 = vmul.f32 %v299, 1.442695
  %v329 = vpow.pop %v328
  %v330 = vmul.f32 %v300, 1.442695
  %v331 = vpow.pop %v330
  %v332 = vmul.f32 %v301, 1.442695
  %v333 = vpow.pop %v332
  %v334 = vsel %vm237, %v303, 0.0
  %335 = vadd.xlane.f32.xlu0 %v334
  %v336 = vpop.xlane.xlu0 %335
  %v337 = vsel %vm237, %v305, 0.0
  %338 = vadd.xlane.f32.xlu0 %v337
  %v339 = vpop.xlane.xlu0 %338
  %v340 = vsel %vm237, %v307, 0.0
  %341 = vadd.xlane.f32.xlu0 %v340
  %v342 = vpop.xlane.xlu0 %341
  %v343 = vsel %vm237, %v309, 0.0
  %344 = vadd.xlane.f32.xlu0 %v343
  %v345 = vpop.xlane.xlu0 %344
  %v346 = vsel %vm237, %v311, 0.0
  %347 = vadd.xlane.f32.xlu0 %v346
  %v348 = vpop.xlane.xlu0 %347
  %v349 = vsel %vm237, %v313, 0.0
  %350 = vadd.xlane.f32.xlu0 %v349
  %v351 = vpop.xlane.xlu0 %350
  %v352 = vsel %vm237, %v315, 0.0
  %353 = vadd.xlane.f32.xlu0 %v352
  %v354 = vpop.xlane.xlu0 %353
  %v355 = vsel %vm237, %v317, 0.0
  %356 = vadd.xlane.f32.xlu0 %v355
  %v357 = vpop.xlane.xlu0 %356
  %v358 = vsel %vm237, %v319, 0.0
  %359 = vadd.xlane.f32.xlu0 %v358
  %v360 = vpop.xlane.xlu0 %359
  %v361 = vsel %vm237, %v321, 0.0
  %362 = vadd.xlane.f32.xlu0 %v361
  %v363 = vpop.xlane.xlu0 %362
  %v364 = vsel %vm237, %v323, 0.0
  %365 = vadd.xlane.f32.xlu0 %v364
  %v366 = vpop.xlane.xlu0 %365
  %v367 = vsel %vm237, %v325, 0.0
  %368 = vadd.xlane.f32.xlu0 %v367
  %v369 = vpop.xlane.xlu0 %368
  %v370 = vsel %vm237, %v327, 0.0
  %371 = vadd.xlane.f32.xlu0 %v370
  %v372 = vpop.xlane.xlu0 %371
  %v373 = vsel %vm237, %v329, 0.0
  %374 = vadd.xlane.f32.xlu0 %v373
  %v375 = vpop.xlane.xlu0 %374
  %v376 = vsel %vm237, %v331, 0.0
  %377 = vadd.xlane.f32.xlu0 %v376
  %v378 = vpop.xlane.xlu0 %377
  %v379 = vsel %vm237, %v333, 0.0
  %380 = vadd.xlane.f32.xlu0 %v379
  %v381 = vpop.xlane.xlu0 %380
  %v382 = vlog2.pop %v336
  %v383 = vmul.f32 %v382, 0.6931472
  %v384 = vlog2.pop %v339
  %v385 = vmul.f32 %v384, 0.6931472
  %v386 = vlog2.pop %v342
  %v387 = vmul.f32 %v386, 0.6931472
  %v388 = vlog2.pop %v345
  %v389 = vmul.f32 %v388, 0.6931472
  %v390 = vlog2.pop %v348
  %v391 = vmul.f32 %v390, 0.6931472
  %v392 = vlog2.pop %v351
  %v393 = vmul.f32 %v392, 0.6931472
  %v394 = vlog2.pop %v354
  %v395 = vmul.f32 %v394, 0.6931472
  %v396 = vlog2.pop %v357
  %v397 = vmul.f32 %v396, 0.6931472
  %v398 = vlog2.pop %v360
  %v399 = vmul.f32 %v398, 0.6931472
  %v400 = vlog2.pop %v363
  %v401 = vmul.f32 %v400, 0.6931472
  %v402 = vlog2.pop %v366
  %v403 = vmul.f32 %v402, 0.6931472
  %v404 = vlog2.pop %v369
  %v405 = vmul.f32 %v404, 0.6931472
  %v406 = vlog2.pop %v372
  %v407 = vmul.f32 %v406, 0.6931472
  %v408 = vlog2.pop %v375
  %v409 = vmul.f32 %v408, 0.6931472
  %v410 = vlog2.pop %v378
  %v411 = vmul.f32 %v410, 0.6931472
  %v412 = vlog2.pop %v381
  %v413 = vmul.f32 %v412, 0.6931472
  %v414 = vlaneseq
  %v415 = vand.u32 %v414, 127
  %416 = vset.pattern.permute.xlu0 0
  %417 = vperm.xlu0 %416, %v41
  %v418 = vpop.permute.xlu0 %417
  %419 = vset.pattern.permute.xlu0 0
  %420 = vperm.xlu0 %419, %v42
  %v421 = vpop.permute.xlu0 %420
  %422 = vset.pattern.permute.xlu0 0
  %423 = vperm.xlu0 %422, %v43
  %v424 = vpop.permute.xlu0 %423
  %425 = vset.pattern.permute.xlu0 0
  %426 = vperm.xlu0 %425, %v44
  %v427 = vpop.permute.xlu0 %426
  %428 = vset.pattern.permute.xlu0 0
  %429 = vperm.xlu0 %428, %v45
  %v430 = vpop.permute.xlu0 %429
  %431 = vset.pattern.permute.xlu0 0
  %432 = vperm.xlu0 %431, %v46
  %v433 = vpop.permute.xlu0 %432
  %434 = vset.pattern.permute.xlu0 0
  %435 = vperm.xlu0 %434, %v47
  %v436 = vpop.permute.xlu0 %435
  %437 = vset.pattern.permute.xlu0 0
  %438 = vperm.xlu0 %437, %v48
  %v439 = vpop.permute.xlu0 %438
  %440 = vset.pattern.permute.xlu0 0
  %441 = vperm.xlu0 %440, %v49
  %v442 = vpop.permute.xlu0 %441
  %443 = vset.pattern.permute.xlu0 0
  %444 = vperm.xlu0 %443, %v50
  %v445 = vpop.permute.xlu0 %444
  %446 = vset.pattern.permute.xlu0 0
  %447 = vperm.xlu0 %446, %v51
  %v448 = vpop.permute.xlu0 %447
  %449 = vset.pattern.permute.xlu0 0
  %450 = vperm.xlu0 %449, %v52
  %v451 = vpop.permute.xlu0 %450
  %452 = vset.pattern.permute.xlu0 0
  %453 = vperm.xlu0 %452, %v53
  %v454 = vpop.permute.xlu0 %453
  %455 = vset.pattern.permute.xlu0 0
  %456 = vperm.xlu0 %455, %v54
  %v457 = vpop.permute.xlu0 %456
  %458 = vset.pattern.permute.xlu0 0
  %459 = vperm.xlu0 %458, %v55
  %v460 = vpop.permute.xlu0 %459
  %461 = vset.pattern.permute.xlu0 0
  %462 = vperm.xlu0 %461, %v56
  %v463 = vpop.permute.xlu0 %462
  %vm464 = vcmp.eq.s32.totalorder %v415, %v418
  %vm465 = vcmp.eq.s32.totalorder %v415, %v421
  %vm466 = vcmp.eq.s32.totalorder %v415, %v424
  %vm467 = vcmp.eq.s32.totalorder %v415, %v427
  %vm468 = vcmp.eq.s32.totalorder %v415, %v430
  %vm469 = vcmp.eq.s32.totalorder %v415, %v433
  %vm470 = vcmp.eq.s32.totalorder %v415, %v436
  %vm471 = vcmp.eq.s32.totalorder %v415, %v439
  %vm472 = vcmp.eq.s32.totalorder %v415, %v442
  %vm473 = vcmp.eq.s32.totalorder %v415, %v445
  %vm474 = vcmp.eq.s32.totalorder %v415, %v448
  %vm475 = vcmp.eq.s32.totalorder %v415, %v451
  %vm476 = vcmp.eq.s32.totalorder %v415, %v454
  %vm477 = vcmp.eq.s32.totalorder %v415, %v457
  %vm478 = vcmp.eq.s32.totalorder %v415, %v460
  %vm479 = vcmp.eq.s32.totalorder %v415, %v463
  %v480 = vsel %vm464, 1, 0
  %v481 = vsel %vm465, 1, 0
  %v482 = vsel %vm466, 1, 0
  %v483 = vsel %vm467, 1, 0
  %v484 = vsel %vm468, 1, 0
  %v485 = vsel %vm469, 1, 0
  %v486 = vsel %vm470, 1, 0
  %v487 = vsel %vm471, 1, 0
  %v488 = vsel %vm472, 1, 0
  %v489 = vsel %vm473, 1, 0
  %v490 = vsel %vm474, 1, 0
  %v491 = vsel %vm475, 1, 0
  %v492 = vsel %vm476, 1, 0
  %v493 = vsel %vm477, 1, 0
  %v494 = vsel %vm478, 1, 0
  %v495 = vsel %vm479, 1, 0
  %v496 = vcvt.s32.f32 %v480
  %v497 = vcvt.s32.f32 %v481
  %v498 = vcvt.s32.f32 %v482
  %v499 = vcvt.s32.f32 %v483
  %v500 = vcvt.s32.f32 %v484
  %v501 = vcvt.s32.f32 %v485
  %v502 = vcvt.s32.f32 %v486
  %v503 = vcvt.s32.f32 %v487
  %v504 = vcvt.s32.f32 %v488
  %v505 = vcvt.s32.f32 %v489
  %v506 = vcvt.s32.f32 %v490
  %v507 = vcvt.s32.f32 %v491
  %v508 = vcvt.s32.f32 %v492
  %v509 = vcvt.s32.f32 %v493
  %v510 = vcvt.s32.f32 %v494
  %v511 = vcvt.s32.f32 %v495
  %v512 = vmul.f32 %v496, %v175
  %v513 = vmul.f32 %v497, %v178
  %v514 = vmul.f32 %v498, %v183
  %v515 = vmul.f32 %v499, %v186
  %v516 = vmul.f32 %v500, %v191
  %v517 = vmul.f32 %v501, %v194
  %v518 = vmul.f32 %v502, %v199
  %v519 = vmul.f32 %v503, %v202
  %v520 = vmul.f32 %v504, %v207
  %v521 = vmul.f32 %v505, %v210
  %v522 = vmul.f32 %v506, %v215
  %v523 = vmul.f32 %v507, %v218
  %v524 = vmul.f32 %v508, %v223
  %v525 = vmul.f32 %v509, %v226
  %v526 = vmul.f32 %v510, %v231
  %v527 = vmul.f32 %v511, %v234
  %v528 = vsel %vm237, %v512, 0.0
  %529 = vadd.xlane.f32.xlu0 %v528
  %v530 = vpop.xlane.xlu0 %529
  %v531 = vsel %vm237, %v513, 0.0
  %532 = vadd.xlane.f32.xlu0 %v531
  %v533 = vpop.xlane.xlu0 %532
  %v534 = vsel %vm237, %v514, 0.0
  %535 = vadd.xlane.f32.xlu0 %v534
  %v536 = vpop.xlane.xlu0 %535
  %v537 = vsel %vm237, %v515, 0.0
  %538 = vadd.xlane.f32.xlu0 %v537
  %v539 = vpop.xlane.xlu0 %538
  %v540 = vsel %vm237, %v516, 0.0
  %541 = vadd.xlane.f32.xlu0 %v540
  %v542 = vpop.xlane.xlu0 %541
  %v543 = vsel %vm237, %v517, 0.0
  %544 = vadd.xlane.f32.xlu0 %v543
  %v545 = vpop.xlane.xlu0 %544
  %v546 = vsel %vm237, %v518, 0.0
  %547 = vadd.xlane.f32.xlu0 %v546
  %v548 = vpop.xlane.xlu0 %547
  %v549 = vsel %vm237, %v519, 0.0
  %550 = vadd.xlane.f32.xlu0 %v549
  %v551 = vpop.xlane.xlu0 %550
  %v552 = vsel %vm237, %v520, 0.0
  %553 = vadd.xlane.f32.xlu0 %v552
  %v554 = vpop.xlane.xlu0 %553
  %v555 = vsel %vm237, %v521, 0.0
  %556 = vadd.xlane.f32.xlu0 %v555
  %v557 = vpop.xlane.xlu0 %556
  %v558 = vsel %vm237, %v522, 0.0
  %559 = vadd.xlane.f32.xlu0 %v558
  %v560 = vpop.xlane.xlu0 %559
  %v561 = vsel %vm237, %v523, 0.0
  %562 = vadd.xlane.f32.xlu0 %v561
  %v563 = vpop.xlane.xlu0 %562
  %v564 = vsel %vm237, %v524, 0.0
  %565 = vadd.xlane.f32.xlu0 %v564
  %v566 = vpop.xlane.xlu0 %565
  %v567 = vsel %vm237, %v525, 0.0
  %568 = vadd.xlane.f32.xlu0 %v567
  %v569 = vpop.xlane.xlu0 %568
  %v570 = vsel %vm237, %v526, 0.0
  %571 = vadd.xlane.f32.xlu0 %v570
  %v572 = vpop.xlane.xlu0 %571
  %v573 = vsel %vm237, %v527, 0.0
  %574 = vadd.xlane.f32.xlu0 %v573
  %v575 = vpop.xlane.xlu0 %574
  %vm576 = vcmp.ne.s32.totalorder %v41, 0
  %vm577 = vcmp.ne.s32.totalorder %v42, 0
  %vm578 = vcmp.ne.s32.totalorder %v43, 0
  %vm579 = vcmp.ne.s32.totalorder %v44, 0
  %vm580 = vcmp.ne.s32.totalorder %v45, 0
  %vm581 = vcmp.ne.s32.totalorder %v46, 0
  %vm582 = vcmp.ne.s32.totalorder %v47, 0
  %vm583 = vcmp.ne.s32.totalorder %v48, 0
  %vm584 = vcmp.ne.s32.totalorder %v49, 0
  %vm585 = vcmp.ne.s32.totalorder %v50, 0
  %vm586 = vcmp.ne.s32.totalorder %v51, 0
  %vm587 = vcmp.ne.s32.totalorder %v52, 0
  %vm588 = vcmp.ne.s32.totalorder %v53, 0
  %vm589 = vcmp.ne.s32.totalorder %v54, 0
  %vm590 = vcmp.ne.s32.totalorder %v55, 0
  %vm591 = vcmp.ne.s32.totalorder %v56, 0
  %v592 = vsel %vm576, 1, 0
  %v593 = vsel %vm577, 1, 0
  %v594 = vsel %vm578, 1, 0
  %v595 = vsel %vm579, 1, 0
  %v596 = vsel %vm580, 1, 0
  %v597 = vsel %vm581, 1, 0
  %v598 = vsel %vm582, 1, 0
  %v599 = vsel %vm583, 1, 0
  %v600 = vsel %vm584, 1, 0
  %v601 = vsel %vm585, 1, 0
  %v602 = vsel %vm586, 1, 0
  %v603 = vsel %vm587, 1, 0
  %v604 = vsel %vm588, 1, 0
  %v605 = vsel %vm589, 1, 0
  %v606 = vsel %vm590, 1, 0
  %v607 = vsel %vm591, 1, 0
  %v608 = vcvt.s32.f32 %v592
  %v609 = vcvt.s32.f32 %v593
  %v610 = vcvt.s32.f32 %v594
  %v611 = vcvt.s32.f32 %v595
  %v612 = vcvt.s32.f32 %v596
  %v613 = vcvt.s32.f32 %v597
  %v614 = vcvt.s32.f32 %v598
  %v615 = vcvt.s32.f32 %v599
  %v616 = vcvt.s32.f32 %v600
  %v617 = vcvt.s32.f32 %v601
  %v618 = vcvt.s32.f32 %v602
  %v619 = vcvt.s32.f32 %v603
  %v620 = vcvt.s32.f32 %v604
  %v621 = vcvt.s32.f32 %v605
  %v622 = vcvt.s32.f32 %v606
  %v623 = vcvt.s32.f32 %v607
  %v624 = vadd.f32 %v240, %v383
  %v625 = vadd.f32 %v243, %v385
  %v626 = vadd.f32 %v246, %v387
  %v627 = vadd.f32 %v249, %v389
  %v628 = vadd.f32 %v252, %v391
  %v629 = vadd.f32 %v255, %v393
  %v630 = vadd.f32 %v258, %v395
  %v631 = vadd.f32 %v261, %v397
  %v632 = vadd.f32 %v264, %v399
  %v633 = vadd.f32 %v267, %v401
  %v634 = vadd.f32 %v270, %v403
  %v635 = vadd.f32 %v273, %v405
  %v636 = vadd.f32 %v276, %v407
  %v637 = vadd.f32 %v279, %v409
  %v638 = vadd.f32 %v282, %v411
  %v639 = vadd.f32 %v285, %v413
  %v640 = vsub.f32 %v624, %v530
  %v641 = vsub.f32 %v625, %v533
  %v642 = vsub.f32 %v626, %v536
  %v643 = vsub.f32 %v627, %v539
  %v644 = vsub.f32 %v628, %v542
  %v645 = vsub.f32 %v629, %v545
  %v646 = vsub.f32 %v630, %v548
  %v647 = vsub.f32 %v631, %v551
  %v648 = vsub.f32 %v632, %v554
  %v649 = vsub.f32 %v633, %v557
  %v650 = vsub.f32 %v634, %v560
  %v651 = vsub.f32 %v635, %v563
  %v652 = vsub.f32 %v636, %v566
  %v653 = vsub.f32 %v637, %v569
  %v654 = vsub.f32 %v638, %v572
  %v655 = vsub.f32 %v639, %v575
  %v656 = vmul.f32 %v640, %v608
  %v657 = vmul.f32 %v641, %v609
  %v658 = vmul.f32 %v642, %v610
  %v659 = vmul.f32 %v643, %v611
  %v660 = vmul.f32 %v644, %v612
  %v661 = vmul.f32 %v645, %v613
  %v662 = vmul.f32 %v646, %v614
  %v663 = vmul.f32 %v647, %v615
  %v664 = vmul.f32 %v648, %v616
  %v665 = vmul.f32 %v649, %v617
  %v666 = vmul.f32 %v650, %v618
  %v667 = vmul.f32 %v651, %v619
  %v668 = vmul.f32 %v652, %v620
  %v669 = vmul.f32 %v653, %v621
  %v670 = vmul.f32 %v654, %v622
  %v671 = vmul.f32 %v655, %v623
  %vm672 = vcmask 7168
  %673 = vst.msk [vmem:[%s5] sm:$0xff] %vm672, %v656
  %674 = vst.msk [vmem:[%s5 + $0x8] sm:$0xff] %vm672, %v657
  %675 = vst.msk [vmem:[%s5 + $0x10] sm:$0xff] %vm672, %v658
  %676 = vst.msk [vmem:[%s5 + $0x18] sm:$0xff] %vm672, %v659
  %677 = vst.msk [vmem:[%s5 + $0x20] sm:$0xff] %vm672, %v660
  %678 = vst.msk [vmem:[%s5 + $0x28] sm:$0xff] %vm672, %v661
  %679 = vst.msk [vmem:[%s5 + $0x30] sm:$0xff] %vm672, %v662
  %680 = vst.msk [vmem:[%s5 + $0x38] sm:$0xff] %vm672, %v663
  %681 = vst.msk [vmem:[%s5 + $0x40] sm:$0xff] %vm672, %v664
  %682 = vst.msk [vmem:[%s5 + $0x48] sm:$0xff] %vm672, %v665
  %683 = vst.msk [vmem:[%s5 + $0x50] sm:$0xff] %vm672, %v666
  %684 = vst.msk [vmem:[%s5 + $0x58] sm:$0xff] %vm672, %v667
  %685 = vst.msk [vmem:[%s5 + $0x60] sm:$0xff] %vm672, %v668
  %686 = vst.msk [vmem:[%s5 + $0x68] sm:$0xff] %vm672, %v669
  %687 = vst.msk [vmem:[%s5 + $0x70] sm:$0xff] %vm672, %v670
  %688 = vst.msk [vmem:[%s5 + $0x78] sm:$0xff] %vm672, %v671
  %vm689 = vcmp.eq.f32.partialorder %v175, %v240
  %vm690 = vcmp.eq.f32.partialorder %v178, %v243
  %vm691 = vcmp.eq.f32.partialorder %v183, %v246
  %vm692 = vcmp.eq.f32.partialorder %v186, %v249
  %vm693 = vcmp.eq.f32.partialorder %v191, %v252
  %vm694 = vcmp.eq.f32.partialorder %v194, %v255
  %vm695 = vcmp.eq.f32.partialorder %v199, %v258
  %vm696 = vcmp.eq.f32.partialorder %v202, %v261
  %vm697 = vcmp.eq.f32.partialorder %v207, %v264
  %vm698 = vcmp.eq.f32.partialorder %v210, %v267
  %vm699 = vcmp.eq.f32.partialorder %v215, %v270
  %vm700 = vcmp.eq.f32.partialorder %v218, %v273
  %vm701 = vcmp.eq.f32.partialorder %v223, %v276
  %vm702 = vcmp.eq.f32.partialorder %v226, %v279
  %vm703 = vcmp.eq.f32.partialorder %v231, %v282
  %vm704 = vcmp.eq.f32.partialorder %v234, %v285
  %v705 = vsel %vm689, %v415, 8
  %v706 = vsel %vm690, %v415, 8
  %v707 = vsel %vm691, %v415, 8
  %v708 = vsel %vm692, %v415, 8
  %v709 = vsel %vm693, %v415, 8
  %v710 = vsel %vm694, %v415, 8
  %v711 = vsel %vm695, %v415, 8
  %v712 = vsel %vm696, %v415, 8
  %v713 = vsel %vm697, %v415, 8
  %v714 = vsel %vm698, %v415, 8
  %v715 = vsel %vm699, %v415, 8
  %v716 = vsel %vm700, %v415, 8
  %v717 = vsel %vm701, %v415, 8
  %v718 = vsel %vm702, %v415, 8
  %v719 = vsel %vm703, %v415, 8
  %v720 = vsel %vm704, %v415, 8
  %v721 = vsel %vm237, %v705, 2147483647
  %v722 = vand.u32 %v721, 65535
  %v723 = vshra.s32 %v721, 16
  %v724 = vcvt.s32.f32 %v722
  %v725 = vcvt.s32.f32 %v723
  %726 = vmin.xlane.f32.xlu0 %v725
  %v727 = vpop.xlane.xlu0 %726
  %vm728 = vcmp.eq.f32.partialorder %v725, %v727
  %v729 = vsel %vm728, %v724, inf
  %730 = vmin.xlane.f32.xlu0 %v729
  %v731 = vpop.xlane.xlu0 %730
  %v732 = vcvt.f32.s32 %v731
  %v733 = vcvt.f32.s32 %v727
  %v734 = vshll.u32 %v733, 16
  %v735 = vadd.s32 %v734, %v732
  %v736 = vsel %vm237, %v706, 2147483647
  %v737 = vand.u32 %v736, 65535
  %v738 = vshra.s32 %v736, 16
  %v739 = vcvt.s32.f32 %v737
  %v740 = vcvt.s32.f32 %v738
  %741 = vmin.xlane.f32.xlu0 %v740
  %v742 = vpop.xlane.xlu0 %741
  %vm743 = vcmp.eq.f32.partialorder %v740, %v742
  %v744 = vsel %vm743, %v739, inf
  %745 = vmin.xlane.f32.xlu0 %v744
  %v746 = vpop.xlane.xlu0 %745
  %v747 = vcvt.f32.s32 %v746
  %v748 = vcvt.f32.s32 %v742
  %v749 = vshll.u32 %v748, 16
  %v750 = vadd.s32 %v749, %v747
  %v751 = vsel %vm237, %v707, 2147483647
  %v752 = vand.u32 %v751, 65535
  %v753 = vshra.s32 %v751, 16
  %v754 = vcvt.s32.f32 %v752
  %v755 = vcvt.s32.f32 %v753
  %756 = vmin.xlane.f32.xlu0 %v755
  %v757 = vpop.xlane.xlu0 %756
  %vm758 = vcmp.eq.f32.partialorder %v755, %v757
  %v759 = vsel %vm758, %v754, inf
  %760 = vmin.xlane.f32.xlu0 %v759
  %v761 = vpop.xlane.xlu0 %760
  %v762 = vcvt.f32.s32 %v761
  %v763 = vcvt.f32.s32 %v757
  %v764 = vshll.u32 %v763, 16
  %v765 = vadd.s32 %v764, %v762
  %v766 = vsel %vm237, %v708, 2147483647
  %v767 = vand.u32 %v766, 65535
  %v768 = vshra.s32 %v766, 16
  %v769 = vcvt.s32.f32 %v767
  %v770 = vcvt.s32.f32 %v768
  %771 = vmin.xlane.f32.xlu0 %v770
  %v772 = vpop.xlane.xlu0 %771
  %vm773 = vcmp.eq.f32.partialorder %v770, %v772
  %v774 = vsel %vm773, %v769, inf
  %775 = vmin.xlane.f32.xlu0 %v774
  %v776 = vpop.xlane.xlu0 %775
  %v777 = vcvt.f32.s32 %v776
  %v778 = vcvt.f32.s32 %v772
  %v779 = vshll.u32 %v778, 16
  %v780 = vadd.s32 %v779, %v777
  %v781 = vsel %vm237, %v709, 2147483647
  %v782 = vand.u32 %v781, 65535
  %v783 = vshra.s32 %v781, 16
  %v784 = vcvt.s32.f32 %v782
  %v785 = vcvt.s32.f32 %v783
  %786 = vmin.xlane.f32.xlu0 %v785
  %v787 = vpop.xlane.xlu0 %786
  %vm788 = vcmp.eq.f32.partialorder %v785, %v787
  %v789 = vsel %vm788, %v784, inf
  %790 = vmin.xlane.f32.xlu0 %v789
  %v791 = vpop.xlane.xlu0 %790
  %v792 = vcvt.f32.s32 %v791
  %v793 = vcvt.f32.s32 %v787
  %v794 = vshll.u32 %v793, 16
  %v795 = vadd.s32 %v794, %v792
  %v796 = vsel %vm237, %v710, 2147483647
  %v797 = vand.u32 %v796, 65535
  %v798 = vshra.s32 %v796, 16
  %v799 = vcvt.s32.f32 %v797
  %v800 = vcvt.s32.f32 %v798
  %801 = vmin.xlane.f32.xlu0 %v800
  %v802 = vpop.xlane.xlu0 %801
  %vm803 = vcmp.eq.f32.partialorder %v800, %v802
  %v804 = vsel %vm803, %v799, inf
  %805 = vmin.xlane.f32.xlu0 %v804
  %v806 = vpop.xlane.xlu0 %805
  %v807 = vcvt.f32.s32 %v806
  %v808 = vcvt.f32.s32 %v802
  %v809 = vshll.u32 %v808, 16
  %v810 = vadd.s32 %v809, %v807
  %v811 = vsel %vm237, %v711, 2147483647
  %v812 = vand.u32 %v811, 65535
  %v813 = vshra.s32 %v811, 16
  %v814 = vcvt.s32.f32 %v812
  %v815 = vcvt.s32.f32 %v813
  %816 = vmin.xlane.f32.xlu0 %v815
  %v817 = vpop.xlane.xlu0 %816
  %vm818 = vcmp.eq.f32.partialorder %v815, %v817
  %v819 = vsel %vm818, %v814, inf
  %820 = vmin.xlane.f32.xlu0 %v819
  %v821 = vpop.xlane.xlu0 %820
  %v822 = vcvt.f32.s32 %v821
  %v823 = vcvt.f32.s32 %v817
  %v824 = vshll.u32 %v823, 16
  %v825 = vadd.s32 %v824, %v822
  %v826 = vsel %vm237, %v712, 2147483647
  %v827 = vand.u32 %v826, 65535
  %v828 = vshra.s32 %v826, 16
  %v829 = vcvt.s32.f32 %v827
  %v830 = vcvt.s32.f32 %v828
  %831 = vmin.xlane.f32.xlu0 %v830
  %v832 = vpop.xlane.xlu0 %831
  %vm833 = vcmp.eq.f32.partialorder %v830, %v832
  %v834 = vsel %vm833, %v829, inf
  %835 = vmin.xlane.f32.xlu0 %v834
  %v836 = vpop.xlane.xlu0 %835
  %v837 = vcvt.f32.s32 %v836
  %v838 = vcvt.f32.s32 %v832
  %v839 = vshll.u32 %v838, 16
  %v840 = vadd.s32 %v839, %v837
  %v841 = vsel %vm237, %v713, 2147483647
  %v842 = vand.u32 %v841, 65535
  %v843 = vshra.s32 %v841, 16
  %v844 = vcvt.s32.f32 %v842
  %v845 = vcvt.s32.f32 %v843
  %846 = vmin.xlane.f32.xlu0 %v845
  %v847 = vpop.xlane.xlu0 %846
  %vm848 = vcmp.eq.f32.partialorder %v845, %v847
  %v849 = vsel %vm848, %v844, inf
  %850 = vmin.xlane.f32.xlu0 %v849
  %v851 = vpop.xlane.xlu0 %850
  %v852 = vcvt.f32.s32 %v851
  %v853 = vcvt.f32.s32 %v847
  %v854 = vshll.u32 %v853, 16
  %v855 = vadd.s32 %v854, %v852
  %v856 = vsel %vm237, %v714, 2147483647
  %v857 = vand.u32 %v856, 65535
  %v858 = vshra.s32 %v856, 16
  %v859 = vcvt.s32.f32 %v857
  %v860 = vcvt.s32.f32 %v858
  %861 = vmin.xlane.f32.xlu0 %v860
  %v862 = vpop.xlane.xlu0 %861
  %vm863 = vcmp.eq.f32.partialorder %v860, %v862
  %v864 = vsel %vm863, %v859, inf
  %865 = vmin.xlane.f32.xlu0 %v864
  %v866 = vpop.xlane.xlu0 %865
  %v867 = vcvt.f32.s32 %v866
  %v868 = vcvt.f32.s32 %v862
  %v869 = vshll.u32 %v868, 16
  %v870 = vadd.s32 %v869, %v867
  %v871 = vsel %vm237, %v715, 2147483647
  %v872 = vand.u32 %v871, 65535
  %v873 = vshra.s32 %v871, 16
  %v874 = vcvt.s32.f32 %v872
  %v875 = vcvt.s32.f32 %v873
  %876 = vmin.xlane.f32.xlu0 %v875
  %v877 = vpop.xlane.xlu0 %876
  %vm878 = vcmp.eq.f32.partialorder %v875, %v877
  %v879 = vsel %vm878, %v874, inf
  %880 = vmin.xlane.f32.xlu0 %v879
  %v881 = vpop.xlane.xlu0 %880
  %v882 = vcvt.f32.s32 %v881
  %v883 = vcvt.f32.s32 %v877
  %v884 = vshll.u32 %v883, 16
  %v885 = vadd.s32 %v884, %v882
  %v886 = vsel %vm237, %v716, 2147483647
  %v887 = vand.u32 %v886, 65535
  %v888 = vshra.s32 %v886, 16
  %v889 = vcvt.s32.f32 %v887
  %v890 = vcvt.s32.f32 %v888
  %891 = vmin.xlane.f32.xlu0 %v890
  %v892 = vpop.xlane.xlu0 %891
  %vm893 = vcmp.eq.f32.partialorder %v890, %v892
  %v894 = vsel %vm893, %v889, inf
  %895 = vmin.xlane.f32.xlu0 %v894
  %v896 = vpop.xlane.xlu0 %895
  %v897 = vcvt.f32.s32 %v896
  %v898 = vcvt.f32.s32 %v892
  %v899 = vshll.u32 %v898, 16
  %v900 = vadd.s32 %v899, %v897
  %v901 = vsel %vm237, %v717, 2147483647
  %v902 = vand.u32 %v901, 65535
  %v903 = vshra.s32 %v901, 16
  %v904 = vcvt.s32.f32 %v902
  %v905 = vcvt.s32.f32 %v903
  %906 = vmin.xlane.f32.xlu0 %v905
  %v907 = vpop.xlane.xlu0 %906
  %vm908 = vcmp.eq.f32.partialorder %v905, %v907
  %v909 = vsel %vm908, %v904, inf
  %910 = vmin.xlane.f32.xlu0 %v909
  %v911 = vpop.xlane.xlu0 %910
  %v912 = vcvt.f32.s32 %v911
  %v913 = vcvt.f32.s32 %v907
  %v914 = vshll.u32 %v913, 16
  %v915 = vadd.s32 %v914, %v912
  %v916 = vsel %vm237, %v718, 2147483647
  %v917 = vand.u32 %v916, 65535
  %v918 = vshra.s32 %v916, 16
  %v919 = vcvt.s32.f32 %v917
  %v920 = vcvt.s32.f32 %v918
  %921 = vmin.xlane.f32.xlu0 %v920
  %v922 = vpop.xlane.xlu0 %921
  %vm923 = vcmp.eq.f32.partialorder %v920, %v922
  %v924 = vsel %vm923, %v919, inf
  %925 = vmin.xlane.f32.xlu0 %v924
  %v926 = vpop.xlane.xlu0 %925
  %v927 = vcvt.f32.s32 %v926
  %v928 = vcvt.f32.s32 %v922
  %v929 = vshll.u32 %v928, 16
  %v930 = vadd.s32 %v929, %v927
  %v931 = vsel %vm237, %v719, 2147483647
  %v932 = vand.u32 %v931, 65535
  %v933 = vshra.s32 %v931, 16
  %v934 = vcvt.s32.f32 %v932
  %v935 = vcvt.s32.f32 %v933
  %936 = vmin.xlane.f32.xlu0 %v935
  %v937 = vpop.xlane.xlu0 %936
  %vm938 = vcmp.eq.f32.partialorder %v935, %v937
  %v939 = vsel %vm938, %v934, inf
  %940 = vmin.xlane.f32.xlu0 %v939
  %v941 = vpop.xlane.xlu0 %940
  %v942 = vcvt.f32.s32 %v941
  %v943 = vcvt.f32.s32 %v937
  %v944 = vshll.u32 %v943, 16
  %v945 = vadd.s32 %v944, %v942
  %v946 = vsel %vm237, %v720, 2147483647
  %v947 = vand.u32 %v946, 65535
  %v948 = vshra.s32 %v946, 16
  %v949 = vcvt.s32.f32 %v947
  %v950 = vcvt.s32.f32 %v948
  %951 = vmin.xlane.f32.xlu0 %v950
  %v952 = vpop.xlane.xlu0 %951
  %vm953 = vcmp.eq.f32.partialorder %v950, %v952
  %v954 = vsel %vm953, %v949, inf
  %955 = vmin.xlane.f32.xlu0 %v954
  %v956 = vpop.xlane.xlu0 %955
  %v957 = vcvt.f32.s32 %v956
  %v958 = vcvt.f32.s32 %v952
  %v959 = vshll.u32 %v958, 16
  %v960 = vadd.s32 %v959, %v957
  %961 = vst.msk [vmem:[%s4] sm:$0xff] %vm672, %v735
  %962 = vst.msk [vmem:[%s4 + $0x8] sm:$0xff] %vm672, %v750
  %963 = vst.msk [vmem:[%s4 + $0x10] sm:$0xff] %vm672, %v765
  %964 = vst.msk [vmem:[%s4 + $0x18] sm:$0xff] %vm672, %v780
  %965 = vst.msk [vmem:[%s4 + $0x20] sm:$0xff] %vm672, %v795
  %966 = vst.msk [vmem:[%s4 + $0x28] sm:$0xff] %vm672, %v810
  %967 = vst.msk [vmem:[%s4 + $0x30] sm:$0xff] %vm672, %v825
  %968 = vst.msk [vmem:[%s4 + $0x38] sm:$0xff] %vm672, %v840
  %969 = vst.msk [vmem:[%s4 + $0x40] sm:$0xff] %vm672, %v855
  %970 = vst.msk [vmem:[%s4 + $0x48] sm:$0xff] %vm672, %v870
  %971 = vst.msk [vmem:[%s4 + $0x50] sm:$0xff] %vm672, %v885
  %972 = vst.msk [vmem:[%s4 + $0x58] sm:$0xff] %vm672, %v900
  %973 = vst.msk [vmem:[%s4 + $0x60] sm:$0xff] %vm672, %v915
  %974 = vst.msk [vmem:[%s4 + $0x68] sm:$0xff] %vm672, %v930
  %975 = vst.msk [vmem:[%s4 + $0x70] sm:$0xff] %vm672, %v945
  %976 = vst.msk [vmem:[%s4 + $0x78] sm:$0xff] %vm672, %v960
  // Predicated region
  $region18: #{tpu_custom_call.1} parent=0 // pred_check
    _
  $region19: #{tpu_custom_call.1} parent=0 // pred_check_branch
    %978 = sbr.rel (0) target = $region21
  $region20: #{tpu_custom_call.1} parent=0 // pred_region
    _
  $region21: #{tpu_custom_call.1} parent=0 // pred_fallthru
    _
  // Predicated region
  $region22: #{tpu_custom_call.1} parent=0 // pred_check
    _
  $region23: #{tpu_custom_call.1} parent=0 // pred_check_branch
    %980 = sbr.rel (0) target = $region25
  $region24: #{tpu_custom_call.1} parent=0 // pred_region
    _
  $region25: #{tpu_custom_call.1} parent=0 // pred_fallthru
    _
  // Predicated region
  $region26: #{tpu_custom_call.1} parent=0 // pred_check
    _
  $region27: #{tpu_custom_call.1} parent=0 // pred_check_branch
    %982 = sbr.rel (0) target = $region29
  $region28: #{tpu_custom_call.1} parent=0 // pred_region
    _
  $region29: #{tpu_custom_call.1} parent=0 // pred_fallthru
    _
  // Predicated region
  $region30: #{tpu_custom_call.1} parent=0 // pred_check
    _
  $region31: #{tpu_custom_call.1} parent=0 // pred_check_branch
    %984 = sbr.rel (0) target = $region33
  $region32: #{tpu_custom_call.1} parent=0 // pred_region
    _
  $region33: #{tpu_custom_call.1} parent=0 // pred_fallthru
    _

</llo_original>
